<compile_context>
chip_gen: v7x
topology: tpu7x:2x2x1
jax: 0.10.0
libtpu: 0.0.40
codegen_flags: <defaults>
</compile_context>

<pallas_src>
import jax
import jax.numpy as jnp
from jax.experimental import pallas as pl
from jax.experimental.pallas import tpu as pltpu


def _dropsample_kernel(scale_ref, x_ref, o_ref):
    # scale_ref: (N, 1)   per-sample factor: keep / (1 - prob), or 1.0 in eval
    # x_ref:     (N, TL)  lane-dense tile of the flattened (N, C*H*W) tensor
    # o_ref:     (N, TL)
    o_ref[...] = x_ref[...] * scale_ref[...]


def _pick_lane_tile(L, max_tl=4096):
    """Largest lane tile that is a multiple of 128, divides L, and is <= max_tl.
    Falls back to the full row (block == full array dim, always legal)."""
    if L <= max_tl:
        return L
    start = max_tl - (max_tl % 128)
    for tl in range(start, 127, -128):
        if L % tl == 0:
            return tl
    return L


def dropsample(x, *, prob=0.0, training=False, key=None):
    """Pallas TPU implementation of Dropsample.forward for an NCHW tensor."""
    N = x.shape[0]
    L = 1
    for d in x.shape[1:]:
        L *= d

    # Per-sample scale, computed once in the wrapper (N scalars).
    if prob == 0.0 or not training:
        scale = jnp.ones((N, 1), dtype=x.dtype)
    else:
        if key is None:
            raise ValueError("training dropsample with prob > 0 needs a PRNG key")
        keep = jax.random.uniform(key, (N, 1), dtype=jnp.float32) > prob
        scale = (keep.astype(jnp.float32) / (1.0 - prob)).astype(x.dtype)

    # Free reshape (contiguous NCHW), no transpose / extra HBM pass.
    x2d = x.reshape(N, L)
    tl = _pick_lane_tile(L)

    out2d = pl.pallas_call(
        _dropsample_kernel,
        out_shape=jax.ShapeDtypeStruct((N, L), x.dtype),
        grid_spec=pltpu.PrefetchScalarGridSpec(
            num_scalar_prefetch=0,
            grid=(L // tl,),
            in_specs=[
                pl.BlockSpec((N, 1), lambda j: (0, 0)),    # per-sample scale
                pl.BlockSpec((N, tl), lambda j: (0, j)),   # x tile (lane-dense)
            ],
            out_specs=pl.BlockSpec((N, tl), lambda j: (0, j)),
        ),
        compiler_params=pltpu.CompilerParams(
            dimension_semantics=("parallel",),
            vmem_limit_bytes=32 * 1024 * 1024,
        ),
    )(scale, x2d)

    return out2d.reshape(x.shape)


if __name__ == "__main__":
    key = jax.random.PRNGKey(0)
    k_x, k_mask = jax.random.split(key)

    N, C, H, W = 2, 4, 16, 16
    x = jax.random.normal(k_x, (N, C, H, W), dtype=jnp.float32)

    # --- eval / prob == 0 path: must be exactly the identity ---
    out_eval = jax.block_until_ready(dropsample(x, prob=0.0, training=False))
    assert out_eval.shape == (N, C, H, W)
    assert jnp.array_equal(out_eval, x)

    # --- training path with prob > 0: per-sample keep-mask scaling ---
    prob = 0.25
    out_train = jax.block_until_ready(
        dropsample(x, prob=prob, training=True, key=k_mask))

    keep = jax.random.uniform(k_mask, (N, 1), dtype=jnp.float32) > prob
    ref_scale = keep.astype(jnp.float32) / (1.0 - prob)
    ref = x * ref_scale[:, :, None, None]
    assert out_train.shape == (N, C, H, W)
    assert jnp.allclose(out_train, ref, atol=1e-6, rtol=1e-6)

    print("KERNEL_OK")
</pallas_src>

<mosaic_0001>
module attributes {stable_mosaic.version = 11 : i64} {
  func.func @_dropsample_kernel(%arg0: i32, %arg1: memref<2x1xf32, #tpu.memory_space<vmem>>, %arg2: memref<2x1024xf32, #tpu.memory_space<vmem>>, %arg3: memref<2x1024xf32, #tpu.memory_space<vmem>>) attributes {dimension_semantics = [#tpu.dimension_semantics<parallel>], iteration_bounds = array<i64: 1>, scalar_prefetch = 0 : i64, scratch_operands = 0 : i64, tpu.core_type = #tpu.core_type<tc>, window_params = [{pipeline_mode = #tpu.pipeline_mode<synchronous>, transform_indices = @transform_0, window_bounds = array<i64: 2, 1>}, {transform_indices = @transform_1, window_bounds = array<i64: 2, 1024>}, {transform_indices = @transform_2, window_bounds = array<i64: 2, 1024>}]} {
    %c0 = arith.constant 0 : index
    %c0_0 = arith.constant 0 : index
    %0 = vector.load %arg2[%c0, %c0_0] : memref<2x1024xf32, #tpu.memory_space<vmem>>, vector<2x1024xf32>
    %c0_1 = arith.constant 0 : index
    %c0_2 = arith.constant 0 : index
    %1 = vector.load %arg1[%c0_1, %c0_2] : memref<2x1xf32, #tpu.memory_space<vmem>>, vector<2x1xf32>
    %2 = vector.broadcast %1 : vector<2x1xf32> to vector<2x1024xf32>
    %3 = arith.mulf %0, %2 : vector<2x1024xf32>
    %c0_3 = arith.constant 0 : index
    %c0_4 = arith.constant 0 : index
    %4 = vector.load %arg3[%c0_3, %c0_4] : memref<2x1024xf32, #tpu.memory_space<vmem>>, vector<2x1024xf32>
    tpu.vector_store %arg3[%c0_3, %c0_4], %3 {strides = array<i32>} : memref<2x1024xf32, #tpu.memory_space<vmem>>, vector<2x1024xf32>,
    return
  }
  func.func @transform_0(%arg0: i32) -> (i32, i32) {
    %c0_i32 = arith.constant 0 : i32
    %c0_i32_0 = arith.constant 0 : i32
    %c0_i32_1 = arith.constant 0 : i32
    return %c0_i32, %c0_i32_0 : i32, i32
  }
  func.func @transform_1(%arg0: i32) -> (i32, i32) {
    %c0_i32 = arith.constant 0 : i32
    %c0_i32_0 = arith.constant 0 : i32
    return %c0_i32, %arg0 : i32, i32
  }
  func.func @transform_2(%arg0: i32) -> (i32, i32) {
    %c0_i32 = arith.constant 0 : i32
    %c0_i32_0 = arith.constant 0 : i32
    return %c0_i32, %arg0 : i32, i32
  }
}

</mosaic_0001>

<llo_original>
// kernel: tpu_custom_call.1
$region0: #{tpu_custom_call.1}
  #allocation0 [shape = 'u32[]', space=smem, size = 0x4, offset = 0x4, fixed_abs, tag = 'smem constant byte address 0x4 - core index']
  #allocation1 [shape = 'u32[144,128]{1,0:T(1,128)}', space=vmem, size = 0x12000, scoped, tag = 'internal scratch']
  %s0 = inlined_call_operand.vmem [shape: f32[2,1], index: 0, kind: input, shape index: {}]
  %s1 = inlined_call_operand.hbm [shape: f32[2,1024], index: 1, kind: input, shape index: {}]
  %s2 = inlined_call_operand.hbm [shape: f32[2,1024], index: 2, kind: output, shape index: {}]
  %s3 = sld [smem:[#allocation0]]
  $region22: #{tpu_custom_call.1} parent=0
    _
  %s5 = ssub.s32 1, %s3
  %s6 = scalar_select 0, %s5, %s3
  $region1: #{tpu_custom_call.1} parent=0
    #allocation2 [shape = 'u8[8192]{0}', space=vmem, size = 0x2000, scoped, tag = 'input window, operand 1, single buffered']
    #allocation3 [shape = 's32[1]{0}', space=sflag, size = 0x4, scoped, tag = 'scoped memory for tpu_custom_call.1']
    #allocation4 [shape = 's32[1]{0}', space=sflag, size = 0x4, scoped, tag = 'scoped memory for tpu_custom_call.1']
    #allocation5 [shape = 'u8[8192]{0}', space=vmem, size = 0x2000, scoped, tag = 'output window, operand 0, single buffered']
    %7 = vsyncpa [#allocation3], 0
    %8 = vsyncpa [#allocation4], 0
    // Predicated region
    $region2: #{tpu_custom_call.1} parent=1 // pred_check
      _
    $region3: #{tpu_custom_call.1} parent=1 // pred_check_branch
      %10 = sbr.rel (0) target = $region5
    $region4: #{tpu_custom_call.1} parent=1 // pred_region
      _
    $region5: #{tpu_custom_call.1} parent=1 // pred_fallthru
      _
    // Predicated region
    $region6: #{tpu_custom_call.1} parent=1 // pred_check
      _
    $region7: #{tpu_custom_call.1} parent=1 // pred_check_branch
      %12 = sbr.rel (0) target = $region9
    $region8: #{tpu_custom_call.1} parent=1 // pred_region
      %s14 = ssub.s32 256, 256
      %15 = vsyncadd [#allocation3], %s14
      %s17 = sshll.u32 [#allocation2], 4
      %s18 = int_to_ptr.vmem [resolvable:$true] %s17
      %20 = dma.hbm_to_vmem [thread:$0]  %s1, 256, %s18, [#allocation3]
    $region9: #{tpu_custom_call.1} parent=1 // pred_fallthru
      _
    // Predicated region
    $region10: #{tpu_custom_call.1} parent=1 // pred_check
      _
    $region11: #{tpu_custom_call.1} parent=1 // pred_check_branch
      %22 = sbr.rel (0) target = $region13
    $region12: #{tpu_custom_call.1} parent=1 // pred_region
      %23 = dma.done [#allocation3], 256
    $region13: #{tpu_custom_call.1} parent=1 // pred_fallthru
      _
    %v24 = vld [vmem:[#allocation2] sm:$0xff]
    %v25 = vld [vmem:[#allocation2 + $0x8] sm:$0xff]
    %v26 = vld [vmem:[%s0] sm:$0x3]
    %28 = vset.pattern.permute.xlu0 0
    %29 = vperm.xlu0 %28, %v26
    %v30 = vpop.permute.xlu0 %29
    %v32 = vunpack.c.l.s4 269488144
    %v33 = vunpack.c.0.s8 %v32
    %v34 = vlaneseq
    %v35 = vshrl.u32 %v34, 7
    %v36 = vsub.s32 %v33, %v35
    %v37 = vrot.slane %v30, %v36
    %v39 = vmul.f32 %v24, %v37
    %v40 = vmul.f32 %v25, %v37
    %41 = vst [vmem:[#allocation5] sm:$0xff] %v39
    %42 = vst [vmem:[#allocation5 + $0x8] sm:$0xff] %v40
    // Predicated region
    $region14: #{tpu_custom_call.1} parent=1 // pred_check
      _
    $region15: #{tpu_custom_call.1} parent=1 // pred_check_branch
      %44 = sbr.rel (0) target = $region17
    $region16: #{tpu_custom_call.1} parent=1 // pred_region
      %s46 = ssub.s32 256, 256
      %47 = vsyncadd [#allocation4], %s46
      %s49 = sshll.u32 [#allocation5], 4
      %s50 = int_to_ptr.vmem [resolvable:$true] %s49
      %52 = dma.vmem_to_hbm [thread:$0]  %s50, 256, %s2, [#allocation4]
    $region17: #{tpu_custom_call.1} parent=1 // pred_fallthru
      _
    // Predicated region
    $region18: #{tpu_custom_call.1} parent=1 // pred_check
      _
    $region19: #{tpu_custom_call.1} parent=1 // pred_check_branch
      %54 = sbr.rel (0) target = $region21
    $region20: #{tpu_custom_call.1} parent=1 // pred_region
      %55 = dma.done [#allocation4], 256
    $region21: #{tpu_custom_call.1} parent=1 // pred_fallthru
      _
    %56 = vsyncpa [#allocation3], 1
    %57 = vsyncpa [#allocation4], 1

</llo_original>
